<compile_context>
chip_gen: v6e
topology: v6e:2x2x1
jax: 0.10.0
libtpu: 0.0.40
codegen_flags: <defaults>
</compile_context>

<pallas_src>
import math

import jax
import jax.numpy as jnp
from jax.experimental import pallas as pl
from jax.experimental.pallas import tpu as pltpu


def _scale_kernel(scale_ref, x_ref, o_ref):
    # scale_ref: (1,) scalar in SMEM; x_ref/o_ref: VMEM tiles.
    o_ref[...] = (x_ref[...] * scale_ref[0]).astype(o_ref.dtype)


# Sublane packing per element size: sub-32-bit dtypes pack along sublanes.
_SUBLANE_PACK = {4: 8, 2: 16, 1: 32}


def scale_forward(
    x: jax.Array,
    scale: jax.Array,
    *,
    lanes: int = 512,
    max_tile_rows: int = 1024,
) -> jax.Array:
    """out = x * scale (scalar), matching nn.Parameter([init_value]) broadcast.

    Works for any input rank/shape: the tensor is flattened to a lane-dense
    (rows, lanes) slab, tiled with large blocks, and reshaped back.
    """
    orig_shape = x.shape
    orig_dtype = x.dtype
    total = math.prod(orig_shape) if orig_shape else 1

    itemsize = jnp.dtype(orig_dtype).itemsize
    pack = _SUBLANE_PACK.get(itemsize, 8)
    # Row tile: multiple of the sublane packing; ~1-2 MiB blocks for f32/bf16.
    tile_rows = max(pack, (max_tile_rows // pack) * pack)

    # Lane-dense flatten: rows of `lanes` elements each.
    rows = -(-total // lanes)                      # ceil(total / lanes)
    if rows <= tile_rows:
        tr = rows                                  # single block == full array
        rows_padded = rows
    else:
        tr = tile_rows
        rows_padded = -(-rows // tr) * tr          # pad rows to a tile multiple

    padded_total = rows_padded * lanes
    flat = x.reshape(-1)
    if padded_total != total:
        flat = jnp.pad(flat, (0, padded_total - total))
    x2d = flat.reshape(rows_padded, lanes)

    grid = (rows_padded // tr,)

    # Keep the parameter in the compute dtype so the in-kernel multiply does
    # not silently promote (matches `input * self.scale` elementwise result).
    scale_c = scale.astype(orig_dtype)

    out2d = pl.pallas_call(
        _scale_kernel,
        out_shape=jax.ShapeDtypeStruct((rows_padded, lanes), orig_dtype),
        grid_spec=pltpu.PrefetchScalarGridSpec(
            num_scalar_prefetch=0,
            grid=grid,
            in_specs=[
                # scalar parameter lives in SMEM, same value every iteration
                pl.BlockSpec(memory_space=pltpu.SMEM),
                pl.BlockSpec((tr, lanes), lambda i: (i, 0)),
            ],
            out_specs=pl.BlockSpec((tr, lanes), lambda i: (i, 0)),
        ),
        compiler_params=pltpu.CompilerParams(
            dimension_semantics=("parallel",),
        ),
    )(scale_c, x2d)

    out_flat = out2d.reshape(-1)
    if padded_total != total:
        out_flat = out_flat[:total]
    return out_flat.reshape(orig_shape)


if __name__ == "__main__":
    key = jax.random.PRNGKey(0)
    # Small NCHW input consistent with how Scale is used on conv feature maps
    # (the bbox_pred output of SMInstHead).
    x = jax.random.normal(key, (2, 4, 16, 16), dtype=jnp.float32)

    # Deterministic parameter init: nn.Parameter(torch.FloatTensor([1.0]))
    init_value = 1.0
    scale = jnp.array([init_value], dtype=jnp.float32)

    out = jax.block_until_ready(scale_forward(x, scale))
    ref = x * scale[0]
    assert out.shape == x.shape and out.dtype == x.dtype
    assert jnp.allclose(out, ref, atol=1e-6, rtol=1e-6)

    # Exercise the multiply with a non-unit scale too (init_value is learnable).
    scale2 = jnp.array([0.37], dtype=jnp.float32)
    out2 = jax.block_until_ready(scale_forward(x, scale2))
    assert jnp.allclose(out2, x * scale2[0], atol=1e-6, rtol=1e-6)

    print("KERNEL_OK")
</pallas_src>

<mosaic_0001>
module attributes {stable_mosaic.version = 11 : i64} {
  func.func @_scale_kernel(%arg0: i32, %arg1: memref<1xf32, #tpu.memory_space<smem>>, %arg2: memref<4x512xf32, #tpu.memory_space<vmem>>, %arg3: memref<4x512xf32, #tpu.memory_space<vmem>>) attributes {dimension_semantics = [#tpu.dimension_semantics<parallel>], iteration_bounds = array<i64: 1>, scalar_prefetch = 0 : i64, scratch_operands = 0 : i64, tpu.core_type = #tpu.core_type<tc>, window_params = [{transform_indices = @transform_0, window_bounds = array<i64: 1>}, {transform_indices = @transform_1, window_bounds = array<i64: 4, 512>}, {transform_indices = @transform_2, window_bounds = array<i64: 4, 512>}]} {
    %c0 = arith.constant 0 : index
    %c0_0 = arith.constant 0 : index
    %0 = vector.load %arg2[%c0, %c0_0] : memref<4x512xf32, #tpu.memory_space<vmem>>, vector<4x512xf32>
    %c0_1 = arith.constant 0 : index
    %1 = memref.load %arg1[%c0_1] : memref<1xf32, #tpu.memory_space<smem>>
    %2 = vector.broadcast %1 : f32 to vector<4x512xf32>
    %3 = arith.mulf %0, %2 : vector<4x512xf32>
    %c0_2 = arith.constant 0 : index
    %c0_3 = arith.constant 0 : index
    %4 = vector.load %arg3[%c0_2, %c0_3] : memref<4x512xf32, #tpu.memory_space<vmem>>, vector<4x512xf32>
    tpu.vector_store %arg3[%c0_2, %c0_3], %3 {strides = array<i32>} : memref<4x512xf32, #tpu.memory_space<vmem>>, vector<4x512xf32>,
    return
  }
  func.func @transform_0(%arg0: i32) -> i32 {
    %c0_i32 = arith.constant 0 : i32
    %c0_i32_0 = arith.constant 0 : i32
    return %c0_i32 : i32
  }
  func.func @transform_1(%arg0: i32) -> (i32, i32) {
    %c0_i32 = arith.constant 0 : i32
    %c0_i32_0 = arith.constant 0 : i32
    return %arg0, %c0_i32 : i32, i32
  }
  func.func @transform_2(%arg0: i32) -> (i32, i32) {
    %c0_i32 = arith.constant 0 : i32
    %c0_i32_0 = arith.constant 0 : i32
    return %arg0, %c0_i32 : i32, i32
  }
}

</mosaic_0001>

<llo_original>
// kernel: tpu_custom_call.1
$region0: #{tpu_custom_call.1}
  #allocation0 [shape = 'u32[]', space=smem, size = 0x4, offset = 0x4, fixed_abs, tag = 'smem constant byte address 0x4 - core index']
  #allocation1 [shape = 'u32[144,128]{1,0:T(1,128)}', space=vmem, size = 0x12000, scoped, tag = 'internal scratch']
  #allocation2 [shape = 'f32[1]{0:T(128)S(6)}', space=smem, size = 0x200, scoped, tag = 'scoped memory for tpu_custom_call.1']
  %s0 = inlined_call_operand.<no memory space> [shape: f32[1], index: 0, kind: input, shape index: {}]
  %s1 = inlined_call_operand.hbm [shape: f32[4,512], index: 1, kind: input, shape index: {}]
  %s2 = inlined_call_operand.hbm [shape: f32[4,512], index: 2, kind: output, shape index: {}]
  %s3 = sld [smem:[#allocation0]]
  $region22: #{tpu_custom_call.1} parent=0
    _
  %s5 = ssub.s32 1, %s3
  %s6 = scalar_select 0, %s5, %s3
  %7 = sst [smem:[#allocation2]] %s0
  $region1: #{tpu_custom_call.1} parent=0
    #allocation3 [shape = 'u8[8192]{0}', space=vmem, size = 0x2000, scoped, tag = 'input window, operand 1, single buffered']
    #allocation4 [shape = 's32[1]{0}', space=sflag, size = 0x4, scoped, tag = 'scoped memory for tpu_custom_call.1']
    #allocation5 [shape = 's32[1]{0}', space=sflag, size = 0x4, scoped, tag = 'scoped memory for tpu_custom_call.1']
    #allocation6 [shape = 'u8[8192]{0}', space=vmem, size = 0x2000, scoped, tag = 'output window, operand 0, single buffered']
    %8 = vsyncpa [#allocation4], 0
    %9 = vsyncpa [#allocation5], 0
    // Predicated region
    $region2: #{tpu_custom_call.1} parent=1 // pred_check
      _
    $region3: #{tpu_custom_call.1} parent=1 // pred_check_branch
      %11 = sbr.rel (0) target = $region5
    $region4: #{tpu_custom_call.1} parent=1 // pred_region
      _
    $region5: #{tpu_custom_call.1} parent=1 // pred_fallthru
      _
    // Predicated region
    $region6: #{tpu_custom_call.1} parent=1 // pred_check
      _
    $region7: #{tpu_custom_call.1} parent=1 // pred_check_branch
      %13 = sbr.rel (0) target = $region9
    $region8: #{tpu_custom_call.1} parent=1 // pred_region
      %s15 = ssub.s32 256, 256
      %16 = vsyncadd [#allocation4], %s15
      %s18 = sshll.u32 [#allocation3], 4
      %s19 = int_to_ptr.vmem [resolvable:$true] %s18
      %21 = dma.hbm_to_vmem [thread:$0]  %s1, 256, %s19, [#allocation4]
    $region9: #{tpu_custom_call.1} parent=1 // pred_fallthru
      _
    // Predicated region
    $region10: #{tpu_custom_call.1} parent=1 // pred_check
      _
    $region11: #{tpu_custom_call.1} parent=1 // pred_check_branch
      %23 = sbr.rel (0) target = $region13
    $region12: #{tpu_custom_call.1} parent=1 // pred_region
      %24 = dma.done [#allocation4], 256
    $region13: #{tpu_custom_call.1} parent=1 // pred_fallthru
      _
    %v25 = vld [vmem:[#allocation3] sm:$0xff]
    %v26 = vld [vmem:[#allocation3 + $0x8] sm:$0xff]
    %s27 = sld [smem:[#allocation2]]
    %v28 = vstv %s27
    %v29 = vmul.f32 %v25, %v28
    %v30 = vmul.f32 %v26, %v28
    %31 = vst [vmem:[#allocation6] sm:$0xff] %v29
    %32 = vst [vmem:[#allocation6 + $0x8] sm:$0xff] %v30
    // Predicated region
    $region14: #{tpu_custom_call.1} parent=1 // pred_check
      _
    $region15: #{tpu_custom_call.1} parent=1 // pred_check_branch
      %34 = sbr.rel (0) target = $region17
    $region16: #{tpu_custom_call.1} parent=1 // pred_region
      %s36 = ssub.s32 256, 256
      %37 = vsyncadd [#allocation5], %s36
      %s39 = sshll.u32 [#allocation6], 4
      %s40 = int_to_ptr.vmem [resolvable:$true] %s39
      %42 = dma.vmem_to_hbm [thread:$0]  %s40, 256, %s2, [#allocation5]
    $region17: #{tpu_custom_call.1} parent=1 // pred_fallthru
      _
    // Predicated region
    $region18: #{tpu_custom_call.1} parent=1 // pred_check
      _
    $region19: #{tpu_custom_call.1} parent=1 // pred_check_branch
      %44 = sbr.rel (0) target = $region21
    $region20: #{tpu_custom_call.1} parent=1 // pred_region
      %45 = dma.done [#allocation5], 256
    $region21: #{tpu_custom_call.1} parent=1 // pred_fallthru
      _
    %46 = vsyncpa [#allocation4], 1
    %47 = vsyncpa [#allocation5], 1

</llo_original>
